<compile_context>
chip_gen: v7x
topology: tpu7x:2x2x1
jax: 0.10.0
libtpu: 0.0.40
codegen_flags: <defaults>
</compile_context>

<pallas_src>
import jax
import jax.numpy as jnp
from jax import lax
from jax.experimental import pallas as pl
from jax.experimental.pallas import tpu as pltpu


def _round_up(x, m):
    return ((x + m - 1) // m) * m


try:  # per-generation VMEM sizing (v5e/v6e: 128 MiB per core, v7x: 64 MiB)
    _VMEM_PHYSICAL = int(pltpu.get_tpu_info().vmem_capacity_bytes)
except Exception:  # older jax / query unavailable -> assume the smallest (v7x)
    _VMEM_PHYSICAL = 64 << 20


def _make_lpl_kernel(TB, T, D, mm_dtype):
    rows = TB * T

    def kernel(z_ref, gram_ref, sum_ref, ssq_ref, sqd_ref):
        j = pl.program_id(1)  # batch-tile index within this split

        # Zero this split's resident accumulators on its first tile.
        @pl.when(j == 0)
        def _init():
            gram_ref[...] = jnp.zeros_like(gram_ref)
            sum_ref[...] = jnp.zeros_like(sum_ref)
            ssq_ref[...] = jnp.zeros_like(ssq_ref)
            sqd_ref[...] = jnp.zeros_like(sqd_ref)

        zb = z_ref[...]                         # (TB, T, D), original dtype
        zf = zb.reshape(rows, D)                # layout-free when T % sublane pack == 0

        # Uncentered Gram on the MXU; operands stay in mm_dtype (bf16 inputs are
        # NOT upcast), accumulation is f32 via preferred_element_type.
        zmm = zf if zf.dtype == mm_dtype else zf.astype(mm_dtype)
        gram_ref[...] += lax.dot_general(
            zmm, zmm,
            dimension_numbers=(((0,), (0,)), ((), ())),
            preferred_element_type=jnp.float32)

        # Cheap VPU lane-vector statistics (hide under the MXU/DMA of the Gram).
        zb32 = zb.astype(jnp.float32)
        zf32 = zb32.reshape(rows, D)
        sum_ref[...] += jnp.sum(zf32, axis=0, keepdims=True)          # (1, D)
        ssq_ref[...] += jnp.sum(zf32 * zf32, axis=0, keepdims=True)   # (1, D)

        # Temporal squared diff kept as a per-feature lane partial (no per-tile
        # full cross-lane reduce / scalar round trip).
        diff = zb32[:, 1:, :] - zb32[:, :-1, :]                       # (TB, T-1, D)
        sqd_ref[...] += jnp.sum(diff * diff, axis=(0, 1),
                                keepdims=True).reshape(1, D)

    return kernel


def lpl_loss(obs_pred, obs_next, z,
             lambda_hebb=0.0001,
             lambda_decorr=0.01,
             epsilon=0.0001,
             block_batch=None,
             matmul_dtype=None):
    """Pallas implementation of LPLLoss.forward.

    obs_pred / obs_next are ignored, exactly as in the reference module.
    `matmul_dtype=jnp.bfloat16` optionally downcasts f32 MXU operands (opt-in).
    """
    del obs_pred, obs_next
    B, T, D = z.shape
    N = B * T
    itemsize = jnp.dtype(z.dtype).itemsize
    mm_dtype = jnp.dtype(matmul_dtype) if matmul_dtype is not None else jnp.dtype(z.dtype)

    gram_bytes = D * D * 4
    vec_out_bytes = 3 * 8 * _round_up(D, 128) * 4
    headroom = 4 << 20

    # Batch-tile budget: ~55% of what remains after the resident Gram/stat blocks.
    usable = max(_VMEM_PHYSICAL - gram_bytes - vec_out_bytes - headroom, 8 << 20)
    budget = int(0.55 * usable)
    per_b = T * D * (2 * itemsize + 4 * 4)   # dbl-buffered input block + f32 temporaries

    if block_batch is None:
        TB = max(1, min(B, budget // per_b))
    else:
        TB = max(1, min(int(block_batch), B))

    n_tiles_total = -(-B // TB)
    # 2-way split on a leading 'parallel' axis -> both v7x TensorCores stream;
    # harmless (near-zero measured cost) on single-core v5e/v6e.
    n_splits = 2 if n_tiles_total >= 2 else 1
    tiles_per_split = -(-n_tiles_total // n_splits)
    B_pad = n_splits * tiles_per_split * TB
    if B_pad != B:
        # Zero batch rows contribute exactly zero to every accumulator, so the
        # padding is mathematically exact (denominators below use the real B/N).
        z = jnp.pad(z, ((0, B_pad - B), (0, 0), (0, 0)))

    vmem_need = (2 * TB * T * D * itemsize        # double-buffered input block
                 + 4 * TB * T * D * 4             # f32 temporaries (cast, diff, products)
                 + gram_bytes + vec_out_bytes + headroom)
    vmem_limit = int(min(max(vmem_need, 32 << 20), int(_VMEM_PHYSICAL * 0.9)))

    kernel = _make_lpl_kernel(TB, T, D, mm_dtype)

    cost = pl.CostEstimate(
        flops=2 * B_pad * T * D * D + 8 * B_pad * T * D,
        transcendentals=0,
        bytes_accessed=B_pad * T * D * itemsize + n_splits * (D * D + 3 * D) * 4)

    # TODO(synk): for very large D (D*D*4 approaching v7x's 64 MiB VMEM, ~D>=2048),
    # add an extra grid axis tiling the (D, D) Gram output instead of keeping it
    # fully VMEM-resident.
    grid_spec = pltpu.PrefetchScalarGridSpec(
        num_scalar_prefetch=0,
        grid=(n_splits, tiles_per_split),                     # (core split, batch tile)
        in_specs=[pl.BlockSpec((TB, T, D),
                               lambda s, j: (s * tiles_per_split + j, 0, 0))],
        out_specs=[pl.BlockSpec((None, D, D), lambda s, j: (s, 0, 0)),
                   pl.BlockSpec((None, 1, D), lambda s, j: (s, 0, 0)),
                   pl.BlockSpec((None, 1, D), lambda s, j: (s, 0, 0)),
                   pl.BlockSpec((None, 1, D), lambda s, j: (s, 0, 0))])

    gram_p, sum_p, ssq_p, sqd_p = pl.pallas_call(
        kernel,
        out_shape=(jax.ShapeDtypeStruct((n_splits, D, D), jnp.float32),  # sum z z^T
                   jax.ShapeDtypeStruct((n_splits, 1, D), jnp.float32),  # sum z
                   jax.ShapeDtypeStruct((n_splits, 1, D), jnp.float32),  # sum z^2
                   jax.ShapeDtypeStruct((n_splits, 1, D), jnp.float32)), # sum diff^2
        grid_spec=grid_spec,
        compiler_params=pltpu.CompilerParams(
            dimension_semantics=("parallel", "arbitrary"),
            vmem_limit_bytes=vmem_limit),
        cost_estimate=cost,
    )(z)

    # ---- tiny JAX epilogue: combine splits, rank-1 centering, scalar loss ----
    gram = jnp.sum(gram_p, axis=0)                 # (D, D)  sum_n z_n z_n^T
    s = jnp.sum(sum_p, axis=0)[0]                  # (D,)    sum_n z_n
    ssq = jnp.sum(ssq_p, axis=0)[0]                # (D,)    sum_n z_n^2
    sqd = jnp.sum(sqd_p)                           # scalar  sum (z_{t+1} - z_t)^2

    inv_n = 1.0 / N
    gram_c = gram - jnp.outer(s, s) * inv_n        # exactly-centered Gram (rank-1 fix)
    diag_c = ssq - s * s * inv_n                   # per-feature centered sum of squares

    # L_hebb: the odd (B + T - 1) denominator faithfully reproduces the module.
    variance = diag_c * (1.0 / (B + T - 1))
    l_hebb = -jnp.mean(jnp.log(variance + epsilon))

    # L_decorr: cov = G_c / (N - 1) with zeroed diagonal (XLA-side, trivial).
    cov = gram_c * (1.0 / (N - 1))
    cov = cov * (1.0 - jnp.eye(D, dtype=jnp.float32))
    l_decorr = jnp.sum(cov * cov) / D

    # L_pred: 0.5 * mean over the B*(T-1)*D squared temporal diffs
    # (torch .detach() only affects gradients; forward value is the plain diff).
    l_pred = 0.5 * sqd / (B * (T - 1) * D)

    return l_pred + lambda_hebb * l_hebb + lambda_decorr * l_decorr


def _lpl_loss_ref(z, lambda_hebb=0.0001, lambda_decorr=0.01, epsilon=0.0001):
    """Pure-JAX reference mirroring the PyTorch math (sanity check)."""
    z = z.astype(jnp.float32)
    B, T, D = z.shape
    l_pred = 0.5 * jnp.mean(jnp.square(z[:, 1:, :] - z[:, :-1, :]))
    z_center = jnp.mean(z, axis=(0, 1))
    variance = jnp.sum(jnp.square(z - z_center), axis=(0, 1)) / (B + T - 1)
    l_hebb = -jnp.mean(jnp.log(variance + epsilon))
    zc = (z - z_center).reshape(B * T, D)
    zc2 = zc - jnp.mean(zc, axis=0, keepdims=True)
    cov = (zc2.T @ zc2) / (B * T - 1)
    cov = cov * (1.0 - jnp.eye(D, dtype=jnp.float32))
    l_decorr = jnp.sum(cov ** 2) / D
    return l_pred + lambda_hebb * l_hebb + lambda_decorr * l_decorr


if __name__ == "__main__":
    key = jax.random.PRNGKey(0)
    k1, k2, k3, k4, k5 = jax.random.split(key, 5)

    # Test 1: shapes implied by the module (batch=2, time=8, features=32);
    # whole problem fits one tile -> grid (1, 1) fast path.
    B, T, D = 2, 8, 32
    z = jax.random.normal(k1, (B, T, D), dtype=jnp.float32)
    obs_pred = jax.random.normal(k2, (B, T, D), dtype=jnp.float32)  # unused, as in torch
    obs_next = jax.random.normal(k3, (B, T, D), dtype=jnp.float32)  # unused, as in torch

    loss = jax.block_until_ready(lpl_loss(obs_pred, obs_next, z))
    ref = jax.block_until_ready(_lpl_loss_ref(z))
    assert jnp.isfinite(loss), "kernel produced non-finite loss"
    assert abs(float(loss) - float(ref)) < 1e-4 * (1.0 + abs(float(ref))), (
        f"mismatch: pallas={float(loss)} ref={float(ref)}")

    # Test 2: odd batch forces the zero-padded last tile, the 2-way (megacore)
    # split, and multi-tile accumulation (grid = (2, 3), B padded 5 -> 6).
    B2, T2, D2 = 5, 8, 128
    z2 = jax.random.normal(k4, (B2, T2, D2), dtype=jnp.float32)
    loss2 = jax.block_until_ready(lpl_loss(None, None, z2, block_batch=1))
    ref2 = jax.block_until_ready(_lpl_loss_ref(z2))
    assert jnp.isfinite(loss2), "tiled kernel produced non-finite loss"
    assert abs(float(loss2) - float(ref2)) < 1e-4 * (1.0 + abs(float(ref2))), (
        f"mismatch (tiled): pallas={float(loss2)} ref={float(ref2)}")

    # Test 3: bf16 input keeps bf16 MXU operands (f32 accumulation).
    z3 = jax.random.normal(k5, (4, 8, 64), dtype=jnp.float32).astype(jnp.bfloat16)
    loss3 = jax.block_until_ready(lpl_loss(None, None, z3))
    ref3 = jax.block_until_ready(_lpl_loss_ref(z3))
    assert jnp.isfinite(loss3), "bf16 kernel produced non-finite loss"
    assert abs(float(loss3) - float(ref3)) < 1e-3 * (1.0 + abs(float(ref3))), (
        f"mismatch (bf16): pallas={float(loss3)} ref={float(ref3)}")

    print("KERNEL_OK")
</pallas_src>

<mosaic_0001>
module attributes {stable_mosaic.version = 11 : i64} {
  func.func @kernel(%arg0: i32, %arg1: i32, %arg2: memref<2x8x32xf32, #tpu.memory_space<vmem>>, %arg3: memref<1x32x32xf32, #tpu.memory_space<vmem>>, %arg4: memref<1x1x32xf32, #tpu.memory_space<vmem>>, %arg5: memref<1x1x32xf32, #tpu.memory_space<vmem>>, %arg6: memref<1x1x32xf32, #tpu.memory_space<vmem>>) attributes {dimension_semantics = [#tpu.dimension_semantics<parallel>, #tpu.dimension_semantics<arbitrary>], iteration_bounds = array<i64: 1, 1>, scalar_prefetch = 0 : i64, scratch_operands = 0 : i64, tpu.core_type = #tpu.core_type<tc>, window_params = [{transform_indices = @transform_0, window_bounds = array<i64: 2, 8, 32>}, {transform_indices = @transform_1, window_bounds = array<i64: 1, 32, 32>}, {transform_indices = @transform_2, window_bounds = array<i64: 1, 1, 32>}, {transform_indices = @transform_3, window_bounds = array<i64: 1, 1, 32>}, {transform_indices = @transform_4, window_bounds = array<i64: 1, 1, 32>}]} {
    %c0_i32 = arith.constant 0 : i32
    %0 = arith.cmpi eq, %arg1, %c0_i32 : i32
    %1 = arith.extui %0 : i1 to i32
    %c0_i32_0 = arith.constant 0 : i32
    %2 = arith.cmpi ne, %1, %c0_i32_0 : i32
    scf.if %2 {
      %cst_30 = arith.constant 0.000000e+00 : f32
      %43 = vector.broadcast %cst_30 : f32 to vector<32x32xf32>
      %c0_31 = arith.constant 0 : index
      %c0_32 = arith.constant 0 : index
      %c0_33 = arith.constant 0 : index
      %44 = vector.load %arg3[%c0_31, %c0_32, %c0_33] : memref<1x32x32xf32, #tpu.memory_space<vmem>>, vector<1x32x32xf32>
      %45 = vector.shape_cast %44 : vector<1x32x32xf32> to vector<32x32xf32>
      %46 = vector.shape_cast %43 : vector<32x32xf32> to vector<1x32x32xf32>
      tpu.vector_store %arg3[%c0_31, %c0_32, %c0_33], %46 {strides = array<i32>} : memref<1x32x32xf32, #tpu.memory_space<vmem>>, vector<1x32x32xf32>,
      %cst_34 = arith.constant 0.000000e+00 : f32
      %47 = vector.broadcast %cst_34 : f32 to vector<1x32xf32>
      %c0_35 = arith.constant 0 : index
      %c0_36 = arith.constant 0 : index
      %c0_37 = arith.constant 0 : index
      %48 = vector.load %arg4[%c0_35, %c0_36, %c0_37] : memref<1x1x32xf32, #tpu.memory_space<vmem>>, vector<1x1x32xf32>
      %49 = vector.shape_cast %48 : vector<1x1x32xf32> to vector<1x32xf32>
      %50 = vector.shape_cast %47 : vector<1x32xf32> to vector<1x1x32xf32>
      tpu.vector_store %arg4[%c0_35, %c0_36, %c0_37], %50 {strides = array<i32>} : memref<1x1x32xf32, #tpu.memory_space<vmem>>, vector<1x1x32xf32>,
      %cst_38 = arith.constant 0.000000e+00 : f32
      %51 = vector.broadcast %cst_38 : f32 to vector<1x32xf32>
      %c0_39 = arith.constant 0 : index
      %c0_40 = arith.constant 0 : index
      %c0_41 = arith.constant 0 : index
      %52 = vector.load %arg5[%c0_39, %c0_40, %c0_41] : memref<1x1x32xf32, #tpu.memory_space<vmem>>, vector<1x1x32xf32>
      %53 = vector.shape_cast %52 : vector<1x1x32xf32> to vector<1x32xf32>
      %54 = vector.shape_cast %51 : vector<1x32xf32> to vector<1x1x32xf32>
      tpu.vector_store %arg5[%c0_39, %c0_40, %c0_41], %54 {strides = array<i32>} : memref<1x1x32xf32, #tpu.memory_space<vmem>>, vector<1x1x32xf32>,
      %cst_42 = arith.constant 0.000000e+00 : f32
      %55 = vector.broadcast %cst_42 : f32 to vector<1x32xf32>
      %c0_43 = arith.constant 0 : index
      %c0_44 = arith.constant 0 : index
      %c0_45 = arith.constant 0 : index
      %56 = vector.load %arg6[%c0_43, %c0_44, %c0_45] : memref<1x1x32xf32, #tpu.memory_space<vmem>>, vector<1x1x32xf32>
      %57 = vector.shape_cast %56 : vector<1x1x32xf32> to vector<1x32xf32>
      %58 = vector.shape_cast %55 : vector<1x32xf32> to vector<1x1x32xf32>
      tpu.vector_store %arg6[%c0_43, %c0_44, %c0_45], %58 {strides = array<i32>} : memref<1x1x32xf32, #tpu.memory_space<vmem>>, vector<1x1x32xf32>,
    } else {
    }
    %c0 = arith.constant 0 : index
    %c0_1 = arith.constant 0 : index
    %c0_2 = arith.constant 0 : index
    %3 = vector.load %arg2[%c0, %c0_1, %c0_2] : memref<2x8x32xf32, #tpu.memory_space<vmem>>, vector<2x8x32xf32>
    %4 = vector.shape_cast %3 : vector<2x8x32xf32> to vector<16x32xf32>
    %c0_3 = arith.constant 0 : index
    %c0_4 = arith.constant 0 : index
    %c0_5 = arith.constant 0 : index
    %5 = vector.load %arg3[%c0_3, %c0_4, %c0_5] : memref<1x32x32xf32, #tpu.memory_space<vmem>>, vector<1x32x32xf32>
    %6 = vector.shape_cast %5 : vector<1x32x32xf32> to vector<32x32xf32>
    %cst = arith.constant dense<0.000000e+00> : vector<32x32xf32>
    %7 = tpu.matmul %4, %4, %cst {dimension_numbers = #tpu.dot_dimension_numbers<[0], [0], [1], [1], [0, 1, 1, 1], [], []>} : vector<16x32xf32>, vector<16x32xf32>, vector<32x32xf32> -> vector<32x32xf32>
    %8 = arith.addf %6, %7 : vector<32x32xf32>
    %c0_6 = arith.constant 0 : index
    %c0_7 = arith.constant 0 : index
    %c0_8 = arith.constant 0 : index
    %9 = vector.load %arg3[%c0_6, %c0_7, %c0_8] : memref<1x32x32xf32, #tpu.memory_space<vmem>>, vector<1x32x32xf32>
    %10 = vector.shape_cast %9 : vector<1x32x32xf32> to vector<32x32xf32>
    %11 = vector.shape_cast %8 : vector<32x32xf32> to vector<1x32x32xf32>
    tpu.vector_store %arg3[%c0_6, %c0_7, %c0_8], %11 {strides = array<i32>} : memref<1x32x32xf32, #tpu.memory_space<vmem>>, vector<1x32x32xf32>,
    %12 = vector.shape_cast %3 : vector<2x8x32xf32> to vector<16x32xf32>
    %c0_9 = arith.constant 0 : index
    %c0_10 = arith.constant 0 : index
    %c0_11 = arith.constant 0 : index
    %13 = vector.load %arg4[%c0_9, %c0_10, %c0_11] : memref<1x1x32xf32, #tpu.memory_space<vmem>>, vector<1x1x32xf32>
    %14 = vector.shape_cast %13 : vector<1x1x32xf32> to vector<1x32xf32>
    %cst_12 = arith.constant dense<0.000000e+00> : vector<32xf32>
    %15 = vector.multi_reduction <add>, %12, %cst_12 [0] : vector<16x32xf32> to vector<32xf32>
    %16 = vector.shape_cast %15 : vector<32xf32> to vector<1x32xf32>
    %17 = arith.addf %14, %16 : vector<1x32xf32>
    %c0_13 = arith.constant 0 : index
    %c0_14 = arith.constant 0 : index
    %c0_15 = arith.constant 0 : index
    %18 = vector.load %arg4[%c0_13, %c0_14, %c0_15] : memref<1x1x32xf32, #tpu.memory_space<vmem>>, vector<1x1x32xf32>
    %19 = vector.shape_cast %18 : vector<1x1x32xf32> to vector<1x32xf32>
    %20 = vector.shape_cast %17 : vector<1x32xf32> to vector<1x1x32xf32>
    tpu.vector_store %arg4[%c0_13, %c0_14, %c0_15], %20 {strides = array<i32>} : memref<1x1x32xf32, #tpu.memory_space<vmem>>, vector<1x1x32xf32>,
    %c0_16 = arith.constant 0 : index
    %c0_17 = arith.constant 0 : index
    %c0_18 = arith.constant 0 : index
    %21 = vector.load %arg5[%c0_16, %c0_17, %c0_18] : memref<1x1x32xf32, #tpu.memory_space<vmem>>, vector<1x1x32xf32>
    %22 = vector.shape_cast %21 : vector<1x1x32xf32> to vector<1x32xf32>
    %23 = arith.mulf %12, %12 : vector<16x32xf32>
    %cst_19 = arith.constant dense<0.000000e+00> : vector<32xf32>
    %24 = vector.multi_reduction <add>, %23, %cst_19 [0] : vector<16x32xf32> to vector<32xf32>
    %25 = vector.shape_cast %24 : vector<32xf32> to vector<1x32xf32>
    %26 = arith.addf %22, %25 : vector<1x32xf32>
    %c0_20 = arith.constant 0 : index
    %c0_21 = arith.constant 0 : index
    %c0_22 = arith.constant 0 : index
    %27 = vector.load %arg5[%c0_20, %c0_21, %c0_22] : memref<1x1x32xf32, #tpu.memory_space<vmem>>, vector<1x1x32xf32>
    %28 = vector.shape_cast %27 : vector<1x1x32xf32> to vector<1x32xf32>
    %29 = vector.shape_cast %26 : vector<1x32xf32> to vector<1x1x32xf32>
    tpu.vector_store %arg5[%c0_20, %c0_21, %c0_22], %29 {strides = array<i32>} : memref<1x1x32xf32, #tpu.memory_space<vmem>>, vector<1x1x32xf32>,
    %30 = vector.extract_strided_slice %3 {offsets = [0, 1, 0], sizes = [2, 7, 32], strides = [1, 1, 1]} : vector<2x8x32xf32> to vector<2x7x32xf32>
    %31 = vector.extract_strided_slice %3 {offsets = [0, 0, 0], sizes = [2, 7, 32], strides = [1, 1, 1]} : vector<2x8x32xf32> to vector<2x7x32xf32>
    %32 = arith.subf %30, %31 : vector<2x7x32xf32>
    %c0_23 = arith.constant 0 : index
    %c0_24 = arith.constant 0 : index
    %c0_25 = arith.constant 0 : index
    %33 = vector.load %arg6[%c0_23, %c0_24, %c0_25] : memref<1x1x32xf32, #tpu.memory_space<vmem>>, vector<1x1x32xf32>
    %34 = vector.shape_cast %33 : vector<1x1x32xf32> to vector<1x32xf32>
    %35 = arith.mulf %32, %32 : vector<2x7x32xf32>
    %cst_26 = arith.constant dense<0.000000e+00> : vector<32xf32>
    %36 = vector.multi_reduction <add>, %35, %cst_26 [0, 1] : vector<2x7x32xf32> to vector<32xf32>
    %37 = vector.shape_cast %36 : vector<32xf32> to vector<1x1x32xf32>
    %38 = vector.shape_cast %37 : vector<1x1x32xf32> to vector<1x32xf32>
    %39 = arith.addf %34, %38 : vector<1x32xf32>
    %c0_27 = arith.constant 0 : index
    %c0_28 = arith.constant 0 : index
    %c0_29 = arith.constant 0 : index
    %40 = vector.load %arg6[%c0_27, %c0_28, %c0_29] : memref<1x1x32xf32, #tpu.memory_space<vmem>>, vector<1x1x32xf32>
    %41 = vector.shape_cast %40 : vector<1x1x32xf32> to vector<1x32xf32>
    %42 = vector.shape_cast %39 : vector<1x32xf32> to vector<1x1x32xf32>
    tpu.vector_store %arg6[%c0_27, %c0_28, %c0_29], %42 {strides = array<i32>} : memref<1x1x32xf32, #tpu.memory_space<vmem>>, vector<1x1x32xf32>,
    return
  }
  func.func @transform_0(%arg0: i32, %arg1: i32) -> (i32, i32, i32) {
    %c1_i32 = arith.constant 1 : i32
    %0 = arith.muli %arg0, %c1_i32 : i32
    %1 = arith.addi %0, %arg1 : i32
    %c0_i32 = arith.constant 0 : i32
    %c0_i32_0 = arith.constant 0 : i32
    %c0_i32_1 = arith.constant 0 : i32
    return %1, %c0_i32, %c0_i32_0 : i32, i32, i32
  }
  func.func @transform_1(%arg0: i32, %arg1: i32) -> (i32, i32, i32) {
    %c0_i32 = arith.constant 0 : i32
    %c0_i32_0 = arith.constant 0 : i32
    %c0_i32_1 = arith.constant 0 : i32
    return %arg0, %c0_i32, %c0_i32_0 : i32, i32, i32
  }
  func.func @transform_2(%arg0: i32, %arg1: i32) -> (i32, i32, i32) {
    %c0_i32 = arith.constant 0 : i32
    %c0_i32_0 = arith.constant 0 : i32
    %c0_i32_1 = arith.constant 0 : i32
    return %arg0, %c0_i32, %c0_i32_0 : i32, i32, i32
  }
  func.func @transform_3(%arg0: i32, %arg1: i32) -> (i32, i32, i32) {
    %c0_i32 = arith.constant 0 : i32
    %c0_i32_0 = arith.constant 0 : i32
    %c0_i32_1 = arith.constant 0 : i32
    return %arg0, %c0_i32, %c0_i32_0 : i32, i32, i32
  }
  func.func @transform_4(%arg0: i32, %arg1: i32) -> (i32, i32, i32) {
    %c0_i32 = arith.constant 0 : i32
    %c0_i32_0 = arith.constant 0 : i32
    %c0_i32_1 = arith.constant 0 : i32
    return %arg0, %c0_i32, %c0_i32_0 : i32, i32, i32
  }
}

</mosaic_0001>

<llo_original>
// kernel: tpu_custom_call.1
$region0: #{tpu_custom_call.1}
  #allocation0 [shape = 'u32[]', space=smem, size = 0x4, offset = 0x4, fixed_abs, tag = 'smem constant byte address 0x4 - core index']
  #allocation1 [shape = 'u32[144,128]{1,0:T(1,128)}', space=vmem, size = 0x12000, scoped, tag = 'internal scratch']
  %s0 = inlined_call_operand.hbm [shape: f32[2,8,32], index: 0, kind: input, shape index: {}]
  %s1 = inlined_call_operand.hbm [shape: f32[1,32,32], index: 1, kind: output, shape index: {0}]
  %s2 = inlined_call_operand.hbm [shape: f32[1,1,32], index: 2, kind: output, shape index: {1}]
  %s3 = inlined_call_operand.hbm [shape: f32[1,1,32], index: 3, kind: output, shape index: {2}]
  %s4 = inlined_call_operand.hbm [shape: f32[1,1,32], index: 4, kind: output, shape index: {3}]
  %5 = xla_tuple %s1, %s2, %s3, %s4
  %s6 = sld [smem:[#allocation0]]
  $region46: #{tpu_custom_call.1} parent=0
    _
  %s8 = ssub.s32 1, %s6
  %s9 = scalar_select 0, %s8, %s6
  $region1: #{tpu_custom_call.1} parent=0
    #allocation2 [shape = 'u8[8192]{0}', space=vmem, size = 0x2000, scoped, tag = 'input window, operand 0, single buffered']
    #allocation3 [shape = 's32[1]{0}', space=sflag, size = 0x4, scoped, tag = 'scoped memory for tpu_custom_call.1']
    #allocation4 [shape = 's32[1]{0}', space=sflag, size = 0x4, scoped, tag = 'scoped memory for tpu_custom_call.1']
    #allocation5 [shape = 'u8[16384]{0}', space=vmem, size = 0x4000, scoped, tag = 'output window, operand 0, single buffered']
    #allocation6 [shape = 'u8[512]{0}', space=vmem, size = 0x400, scoped, tag = 'output window, operand 1, single buffered']
    #allocation7 [shape = 's32[1]{0}', space=sflag, size = 0x4, scoped, tag = 'scoped memory for tpu_custom_call.1']
    #allocation8 [shape = 'u8[512]{0}', space=vmem, size = 0x400, scoped, tag = 'output window, operand 2, single buffered']
    #allocation9 [shape = 'u8[512]{0}', space=vmem, size = 0x400, scoped, tag = 'output window, operand 3, single buffered']
    #allocation10 [shape = 's32[1]{0}', space=sflag, size = 0x4, scoped, tag = 'scoped memory for tpu_custom_call.1']
    %10 = vsyncpa [#allocation3], 0
    %11 = vsyncpa [#allocation4], 0
    %12 = vsyncpa [#allocation7], 0
    %13 = vsyncpa [#allocation10], 0
    // Predicated region
    $region2: #{tpu_custom_call.1} parent=1 // pred_check
      _
    $region3: #{tpu_custom_call.1} parent=1 // pred_check_branch
      %15 = sbr.rel (0) target = $region5
    $region4: #{tpu_custom_call.1} parent=1 // pred_region
      %s16 = sadd.s32 0, 0
      %s17 = smul.u32 2, %s16
      %s19 = ssub.s32 256, 256
      %20 = vsyncadd [#allocation3], %s19
      %s21 = smul.addr %s17, 128
      %s22 = scalar_lea.hbm %s0, %s21
      %s23 = sshll.u32 [#allocation2], 4
      %s24 = int_to_ptr.vmem [resolvable:$true] %s23
      %29 = dma.hbm_to_vmem [thread:$0]  %s22, 256, %s24, [#allocation3], 128, 128, 8
    $region5: #{tpu_custom_call.1} parent=1 // pred_fallthru
      _
    // Predicated region
    $region6: #{tpu_custom_call.1} parent=1 // pred_check
      _
    $region7: #{tpu_custom_call.1} parent=1 // pred_check_branch
      %31 = sbr.rel (0) target = $region9
    $region8: #{tpu_custom_call.1} parent=1 // pred_region
      %32 = dma.done [#allocation3], 256
    $region9: #{tpu_custom_call.1} parent=1 // pred_fallthru
      _
    %s33 = sadd.s32 0, 0
    %s34 = smul.u32 2, %s33
    %p35 = scmp.eq.s32.totalorder 0, 0
    // Predicated region
    $region10: #{tpu_custom_call.1} parent=1 // pred_check
      %p36 = pneg %p35
    $region11: #{tpu_custom_call.1} parent=1 // pred_check_branch
      %38 = sbr.rel (%p36) target = $region13
    $region12: #{tpu_custom_call.1} parent=1 // pred_region
      %vm39 = vcmask 261120
      %40 = vst.msk [vmem:[#allocation5] sm:$0xff] %vm39, 0.0
      %41 = vst.msk [vmem:[#allocation5 + $0x8] sm:$0xff] %vm39, 0.0
      %42 = vst.msk [vmem:[#allocation5 + $0x10] sm:$0xff] %vm39, 0.0
      %43 = vst.msk [vmem:[#allocation5 + $0x18] sm:$0xff] %vm39, 0.0
      %vm44 = vcmask 253952
      %45 = vst.msk [vmem:[#allocation6] sm:$0x1] %vm44, 0.0
      %46 = vst.msk [vmem:[#allocation8] sm:$0x1] %vm44, 0.0
      %47 = vst.msk [vmem:[#allocation9] sm:$0x1] %vm44, 0.0
    $region13: #{tpu_custom_call.1} parent=1 // pred_fallthru
      _
    %v48 = vld [vmem:[#allocation2] sm:$0xff]
    %v49 = vld [vmem:[#allocation2 + $0x8] sm:$0xff]
    %v50 = vld [vmem:[#allocation5] sm:$0xff]
    %v51 = vld [vmem:[#allocation5 + $0x8] sm:$0xff]
    %v52 = vld [vmem:[#allocation5 + $0x10] sm:$0xff]
    %v53 = vld [vmem:[#allocation5 + $0x18] sm:$0xff]
    %54 = vxpose.xlu0.b32.start [1/16] %v48, 128
    %55 = vxpose.xlu0.b32.cont [2/16] %v49, 128
    %56 = vxpose.xlu0.b32.cont [3/16] 0.0, 128
    %57 = vxpose.xlu0.b32.cont [4/16] 0.0, 128
    %58 = vxpose.xlu0.b32.cont [5/16] 0.0, 128
    %59 = vxpose.xlu0.b32.cont [6/16] 0.0, 128
    %60 = vxpose.xlu0.b32.cont [7/16] 0.0, 128
    %61 = vxpose.xlu0.b32.cont [8/16] 0.0, 128
    %62 = vxpose.xlu0.b32.cont [9/16] 0.0, 128
    %63 = vxpose.xlu0.b32.cont [10/16] 0.0, 128
    %64 = vxpose.xlu0.b32.cont [11/16] 0.0, 128
    %65 = vxpose.xlu0.b32.cont [12/16] 0.0, 128
    %66 = vxpose.xlu0.b32.cont [13/16] 0.0, 128
    %67 = vxpose.xlu0.b32.cont [14/16] 0.0, 128
    %68 = vxpose.xlu0.b32.cont [15/16] 0.0, 128
    %69 = vxpose.xlu0.b32.end [16/16] 0.0, 128
    %v70 = vpop.trf.xlu0
    %v71 = vpop.trf.xlu0
    %v72 = vpop.trf.xlu0
    %v73 = vpop.trf.xlu0
    %v74 = vpop.trf.xlu0
    %v75 = vpop.trf.xlu0
    %v76 = vpop.trf.xlu0
    %v77 = vpop.trf.xlu0
    %v78 = vpop.trf.xlu0
    %v79 = vpop.trf.xlu0
    %v80 = vpop.trf.xlu0
    %v81 = vpop.trf.xlu0
    %v82 = vpop.trf.xlu0
    %v83 = vpop.trf.xlu0
    %v84 = vpop.trf.xlu0
    %v85 = vpop.trf.xlu0
    %vm86 = vcmask 130048
    %v88 = vsel %vm86, %v70, 0
    %v91 = vsel %vm86, %v71, 0
    %v94 = vsel %vm86, %v72, 0
    %v97 = vsel %vm86, %v73, 0
    %99 = vmatprep.subr.mxu0 0.0
    %100 = vmatpush1.msra.mxu0 %v48
    %101 = vmatprep.subr.mxu0 0.0
    %102 = vmatpush1.msra.mxu0 %v49
    %103 = vmatprep.subr.mxu0 0.0
    %104 = vmatpush1.msra.mxu0 0.0
    %105 = vmatprep.subr.mxu0 0.0
    %106 = vmatpush1.msra.mxu0 0.0
    %107 = vmatprep.subr.mxu0 0.0
    %108 = vmatpush1.msra.mxu0 0.0
    %109 = vmatprep.subr.mxu0 0.0
    %110 = vmatpush1.msra.mxu0 0.0
    %111 = vmatprep.subr.mxu0 0.0
    %112 = vmatpush1.msra.mxu0 0.0
    %113 = vmatprep.subr.mxu0 0.0
    %114 = vmatpush1.msra.mxu0 0.0
    %115 = vmatprep.subr.mxu0 0.0
    %116 = vmatpush1.msra.mxu0 0.0
    %117 = vmatprep.subr.mxu0 0.0
    %118 = vmatpush1.msra.mxu0 0.0
    %119 = vmatprep.subr.mxu0 0.0
    %120 = vmatpush1.msra.mxu0 0.0
    %121 = vmatprep.subr.mxu0 0.0
    %122 = vmatpush1.msra.mxu0 0.0
    %123 = vmatprep.subr.mxu0 0.0
    %124 = vmatpush1.msra.mxu0 0.0
    %125 = vmatprep.subr.mxu0 0.0
    %126 = vmatpush1.msra.mxu0 0.0
    %127 = vmatprep.subr.mxu0 0.0
    %128 = vmatpush1.msra.mxu0 0.0
    %129 = vmatprep.subr.mxu0 0.0
    %130 = vmatpush1.msra.mxu0 0.0
    %131 = vmatprep.subr.mxu0 0.0
    %132 = vmatpush1.msra.mxu0 0.0
    %133 = vmatprep.subr.mxu0 0.0
    %134 = vmatpush1.msra.mxu0 0.0
    %135 = vmatprep.subr.mxu0 0.0
    %136 = vmatpush1.msra.mxu0 0.0
    %137 = vmatprep.subr.mxu0 0.0
    %138 = vmatpush1.msra.mxu0 0.0
    %139 = vmatprep.subr.mxu0 0.0
    %140 = vmatpush1.msra.mxu0 0.0
    %141 = vmatprep.subr.mxu0 0.0
    %142 = vmatpush1.msra.mxu0 0.0
    %143 = vmatprep.subr.mxu0 0.0
    %144 = vmatpush1.msra.mxu0 0.0
    %145 = vmatprep.subr.mxu0 0.0
    %146 = vmatpush1.msra.mxu0 0.0
    %147 = vmatprep.subr.mxu0 0.0
    %148 = vmatpush1.msra.mxu0 0.0
    %149 = vmatprep.subr.mxu0 0.0
    %150 = vmatpush1.msra.mxu0 0.0
    %151 = vmatprep.subr.mxu0 0.0
    %152 = vmatpush1.msra.mxu0 0.0
    %153 = vmatprep.subr.mxu0 0.0
    %154 = vmatpush1.msra.mxu0 0.0
    %155 = vmatprep.subr.mxu0 0.0
    %156 = vmatpush1.msra.mxu0 0.0
    %157 = vmatprep.subr.mxu0 0.0
    %158 = vmatpush1.msra.mxu0 0.0
    %159 = vmatprep.subr.mxu0 0.0
    %160 = vmatpush1.msra.mxu0 0.0
    %161 = vmatprep.subr.mxu0 0.0
    %162 = vmatpush1.msra.mxu0 0.0
    %163 = vmatprep.mubr.f32.mxu0 0.0
    %164 = vmatmul.mubr.f32.gmra.mrb[0].mxu0 %v88
    %v165 = vpop.f32.mrb[0].mxu0
    %v166 = vadd.f32 0.0, %v165
    %v167 = vpop.f32.mrb[0].mxu0
    %168 = vmatprep.mubr.f32.mxu0 0.0
    %169 = vmatmul.mubr.f32.gmra.mrb[0].mxu0 %v91
    %v170 = vpop.f32.mrb[0].mxu0
    %v171 = vadd.f32 0.0, %v170
    %v172 = vpop.f32.mrb[0].mxu0
    %173 = vmatprep.mubr.f32.mxu0 0.0
    %174 = vmatmul.mubr.f32.gmra.mrb[0].mxu0 %v94
    %v175 = vpop.f32.mrb[0].mxu0
    %v176 = vadd.f32 0.0, %v175
    %v177 = vpop.f32.mrb[0].mxu0
    %178 = vmatprep.mubr.f32.mxu0 0.0
    %179 = vmatmul.mubr.f32.gmra.mrb[0].mxu0 %v97
    %v180 = vpop.f32.mrb[0].mxu0
    %v181 = vadd.f32 0.0, %v180
    %v182 = vpop.f32.mrb[0].mxu0
    %183 = vdwg.mxu0
    %v184 = vadd.f32 %v50, %v166
    %v185 = vadd.f32 %v51, %v171
    %v186 = vadd.f32 %v52, %v176
    %v187 = vadd.f32 %v53, %v181
    %vm188 = vcmask 261120
    %189 = vst.msk [vmem:[#allocation5] sm:$0xff] %vm188, %v184
    %190 = vst.msk [vmem:[#allocation5 + $0x8] sm:$0xff] %vm188, %v185
    %191 = vst.msk [vmem:[#allocation5 + $0x10] sm:$0xff] %vm188, %v186
    %192 = vst.msk [vmem:[#allocation5 + $0x18] sm:$0xff] %vm188, %v187
    %v193 = vld [vmem:[#allocation6] sm:$0x1]
    %v194 = vsel %vm188, %v48, 0.0
    %v195 = vsel %vm188, %v49, 0.0
    %v196 = vadd.f32 %v194, %v195
    %v197 = vrot.slane %v196, 4
    %v198 = vadd.f32 %v196, %v197
    %v199 = vrot.slane %v198, 2
    %v200 = vadd.f32 %v198, %v199
    %v201 = vrot.slane %v200, 1
    %v202 = vadd.f32 %v200, %v201
    %v203 = vadd.f32 %v193, %v202
    %vm204 = vcmask 253952
    %205 = vst.msk [vmem:[#allocation6] sm:$0x1] %vm204, %v203
    %v206 = vld [vmem:[#allocation8] sm:$0x1]
    %v207 = vmul.f32 %v48, %v48
    %v208 = vmul.f32 %v49, %v49
    %v209 = vsel %vm188, %v207, 0.0
    %v210 = vsel %vm188, %v208, 0.0
    %v211 = vadd.f32 %v209, %v210
    %v212 = vrot.slane %v211, 4
    %v213 = vadd.f32 %v211, %v212
    %v214 = vrot.slane %v213, 2
    %v215 = vadd.f32 %v213, %v214
    %v216 = vrot.slane %v215, 1
    %v217 = vadd.f32 %v215, %v216
    %v218 = vadd.f32 %v206, %v217
    %219 = vst.msk [vmem:[#allocation8] sm:$0x1] %vm204, %v218
    %v222 = vrot.slane %v48, 7
    %v223 = vrot.slane %v49, 7
    %v226 = vsub.f32 %v48, %v222
    %v227 = vsub.f32 %v49, %v223
    %v228 = vld [vmem:[#allocation9] sm:$0x1]
    %v229 = vmul.f32 %v226, %v226
    %v230 = vmul.f32 %v227, %v227
    %v233 = vrot.slane %v229, 1
    %v234 = vrot.slane %v230, 1
    %vm237 = vcmask 260096
    %v238 = vsel %vm237, %v233, 0.0
    %v239 = vsel %vm237, %v234, 0.0
    %v240 = vadd.f32 %v238, %v239
    %v241 = vrot.slane %v240, 4
    %v242 = vadd.f32 %v240, %v241
    %v243 = vrot.slane %v242, 2
    %v244 = vadd.f32 %v242, %v243
    %v245 = vrot.slane %v244, 1
    %v246 = vadd.f32 %v244, %v245
    %v247 = vadd.f32 %v228, %v246
    %248 = vst.msk [vmem:[#allocation9] sm:$0x1] %vm204, %v247
    // Predicated region
    $region14: #{tpu_custom_call.1} parent=1 // pred_check
      _
    $region15: #{tpu_custom_call.1} parent=1 // pred_check_branch
      %250 = sbr.rel (0) target = $region17
    $region16: #{tpu_custom_call.1} parent=1 // pred_region
      %s252 = ssub.s32 512, 512
      %253 = vsyncadd [#allocation4], %s252
      %s254 = sshll.u32 [#allocation5], 4
      %s255 = int_to_ptr.vmem [resolvable:$true] %s254
      %260 = dma.vmem_to_hbm [thread:$0]  %s255, 512, %s1, [#allocation4], 128, 128, 8
    $region17: #{tpu_custom_call.1} parent=1 // pred_fallthru
      _
    // Predicated region
    $region18: #{tpu_custom_call.1} parent=1 // pred_check
      _
    $region19: #{tpu_custom_call.1} parent=1 // pred_check_branch
      %262 = sbr.rel (0) target = $region21
    $region20: #{tpu_custom_call.1} parent=1 // pred_region
      %s264 = ssub.s32 16, 16
      %265 = vsyncadd [#allocation7], %s264
      %s267 = sshll.u32 [#allocation6], 4
      %s268 = int_to_ptr.vmem [resolvable:$true] %s267
      %270 = dma.vmem_to_hbm [thread:$0]  %s268, 16, %s2, [#allocation7]
    $region21: #{tpu_custom_call.1} parent=1 // pred_fallthru
      _
    // Predicated region
    $region22: #{tpu_custom_call.1} parent=1 // pred_check
      _
    $region23: #{tpu_custom_call.1} parent=1 // pred_check_branch
      %272 = sbr.rel (0) target = $region25
    $region24: #{tpu_custom_call.1} parent=1 // pred_region
      %s274 = ssub.s32 16, 16
      %275 = vsyncadd [#allocation7], %s274
      %s277 = sshll.u32 [#allocation8], 4
      %s278 = int_to_ptr.vmem [resolvable:$true] %s277
      %280 = dma.vmem_to_hbm [thread:$0]  %s278, 16, %s3, [#allocation7]
    $region25: #{tpu_custom_call.1} parent=1 // pred_fallthru
      _
    // Predicated region
    $region26: #{tpu_custom_call.1} parent=1 // pred_check
      _
    $region27: #{tpu_custom_call.1} parent=1 // pred_check_branch
      %282 = sbr.rel (0) target = $region29
    $region28: #{tpu_custom_call.1} parent=1 // pred_region
      %s284 = ssub.s32 16, 16
      %285 = vsyncadd [#allocation10], %s284
      %s287 = sshll.u32 [#allocation9], 4
      %s288 = int_to_ptr.vmem [resolvable:$true] %s287
      %290 = dma.vmem_to_hbm [thread:$0]  %s288, 16, %s4, [#allocation10]
    $region29: #{tpu_custom_call.1} parent=1 // pred_fallthru
      _
    // Predicated region
    $region30: #{tpu_custom_call.1} parent=1 // pred_check
      _
    $region31: #{tpu_custom_call.1} parent=1 // pred_check_branch
      %292 = sbr.rel (0) target = $region33
    $region32: #{tpu_custom_call.1} parent=1 // pred_region
      %293 = dma.done [#allocation4], 512
    $region33: #{tpu_custom_call.1} parent=1 // pred_fallthru
      _
    // Predicated region
    $region34: #{tpu_custom_call.1} parent=1 // pred_check
      _
    $region35: #{tpu_custom_call.1} parent=1 // pred_check_branch
      %295 = sbr.rel (0) target = $region37
    $region36: #{tpu_custom_call.1} parent=1 // pred_region
      %296 = dma.done [#allocation7], 16
    $region37: #{tpu_custom_call.1} parent=1 // pred_fallthru
      _
    // Predicated region
    $region38: #{tpu_custom_call.1} parent=1 // pred_check
      _
    $region39: #{tpu_custom_call.1} parent=1 // pred_check_branch
      %298 = sbr.rel (0) target = $region41
    $region40: #{tpu_custom_call.1} parent=1 // pred_region
      %299 = dma.done [#allocation7], 16
    $region41: #{tpu_custom_call.1} parent=1 // pred_fallthru
      _
    // Predicated region
    $region42: #{tpu_custom_call.1} parent=1 // pred_check
      _
    $region43: #{tpu_custom_call.1} parent=1 // pred_check_branch
      %301 = sbr.rel (0) target = $region45
    $region44: #{tpu_custom_call.1} parent=1 // pred_region
      %302 = dma.done [#allocation10], 16
    $region45: #{tpu_custom_call.1} parent=1 // pred_fallthru
      _
    %303 = vsyncpa [#allocation3], 1
    %304 = vsyncpa [#allocation4], 1
    %305 = vsyncpa [#allocation7], 1
    %306 = vsyncpa [#allocation10], 1

</llo_original>
